<compile_context>
chip_gen: v6e
topology: v6e:2x2x1
jax: 0.10.0
libtpu: 0.0.40
codegen_flags: <defaults>
</compile_context>

<pallas_src>
import functools

import jax
import jax.numpy as jnp
from jax.experimental import pallas as pl
from jax.experimental.pallas import tpu as pltpu

N_SEGMENT = 3
FOLD_DIV = 3

# ~4 MiB blocks: big enough to amortize the ~0.35 us per-grid-step overhead
# (relatively more important on v7x's faster HBM), small enough that the
# double-buffered in+out footprint (~4x a block ~= 16 MiB) stays inside the
# explicit 32 MiB vmem limit set below on every generation.
_TARGET_BLOCK_BYTES = 4 * 1024 * 1024
_VMEM_LIMIT_FLOOR = 32 * 1024 * 1024
_VMEM_LIMIT_CEIL = 64 * 1024 * 1024   # v7x physical VMEM per TensorCore


def _cdiv(a, b):
    return -(-a // b)


def _has_multiple_tensorcores():
    """True if the chip has >1 TensorCore sharing the grid (v4/v5p/v7x)."""
    try:
        kind = jax.devices()[0].device_kind.lower()
    except Exception:
        return True
    # v5e / v6e have a single TensorCore per chip.
    for tag in ("v5 lite", "v5e", "v5litepod", "v6 lite", "v6e"):
        if tag in kind:
            return False
    return True


def _tsm_kernel(x_ref, o_ref, *, n_segment, fold1, fold2):
    """Shifted copy for one (b_tile, n_segment, C_blk, hw_tile) block.

    Channel groups (all slice bounds are static Python ints):
      [0, fold1)      <- forward shift  (x at t+1; zeros at the last step)
      [fold1, fold2)  <- backward shift (x at t-1; zeros at the first step)
      [fold2, C_blk)  <- identity
    Each group is a single time-range copy (+ one boundary zero write for the
    shifted groups) rather than a per-timestep loop.
    """
    b_tile, _, c_blk, hw_tile = o_ref.shape
    dt = o_ref.dtype

    zeros_fwd = None
    if fold1 > 0:
        if n_segment > 1:
            o_ref[:, : n_segment - 1, :fold1, :] = x_ref[:, 1:, :fold1, :]
        zeros_fwd = jnp.zeros((b_tile, fold1, hw_tile), dt)
        o_ref[:, n_segment - 1, :fold1, :] = zeros_fwd
    if fold2 > fold1:
        if n_segment > 1:
            o_ref[:, 1:, fold1:fold2, :] = x_ref[:, : n_segment - 1, fold1:fold2, :]
        if fold2 - fold1 == fold1 and zeros_fwd is not None:
            zeros_bwd = zeros_fwd            # reuse the hoisted zero splat
        else:
            zeros_bwd = jnp.zeros((b_tile, fold2 - fold1, hw_tile), dt)
        o_ref[:, 0, fold1:fold2, :] = zeros_bwd
    if c_blk > fold2:
        o_ref[:, :, fold2:, :] = x_ref[:, :, fold2:, :]


def _choose_tiles(n_batch, n_segment, c_blk, hw, itemsize, multi_core):
    """Pick (b_tile, hw_tile).  hw_tile is a multiple of 128 or == hw."""
    per_batch = n_segment * c_blk * hw * itemsize
    if per_batch > _TARGET_BLOCK_BYTES and hw > 128:
        # Large feature maps: one batch element per step, tile the lane axis
        # in multiples of 128 so output stores stay lane-dense / unmasked.
        b_tile = 1
        hw_tile = (_TARGET_BLOCK_BYTES // (n_segment * c_blk * itemsize)) // 128 * 128
        hw_tile = int(min(max(hw_tile, 128), hw))
    else:
        # Small feature maps: fold batch elements together to amortize the
        # per-grid-step overhead.  No divisor search: a non-dividing b_tile is
        # fine (cdiv grid, Pallas masks the partial last block).
        b_tile = int(max(1, _TARGET_BLOCK_BYTES // max(per_batch, 1)))
        b_tile = min(b_tile, n_batch)
        hw_tile = hw
        if multi_core and b_tile >= n_batch and n_batch >= 2:
            # >1 TensorCore (v7x): keep >= 2 batch steps so both get work.
            b_tile = _cdiv(n_batch, 2)
    # >1 TensorCore: if the grid degenerated to a single step, split the lane
    # axis (multiples of 128) so the second core is not idle.
    if multi_core and _cdiv(n_batch, b_tile) * _cdiv(hw, hw_tile) < 2 and hw > 128:
        hw_tile = max(128, _cdiv(_cdiv(hw, 2), 128) * 128)
    return b_tile, hw_tile


def tsm_forward(x, n_segment=N_SEGMENT, fold_div=FOLD_DIV, *, alias_input=False):
    """TSM forward pass.

    Set alias_input=True only when the caller donates x (e.g. jit
    donate_argnums): the identity channel group is then left untouched in the
    aliased buffer and the kernel only moves the shifted channels.
    """
    nt, c, h, w = x.shape
    assert nt % n_segment == 0, "nt must be divisible by n_segment"
    assert fold_div >= 1, "fold_div must be >= 1"
    n_batch = nt // n_segment
    hw = h * w
    itemsize = x.dtype.itemsize

    fold = c // fold_div
    fold1 = min(fold, c)            # end of forward-shift group
    fold2 = min(2 * fold, c)        # end of backward-shift group

    if fold1 == 0:
        # c < fold_div: the whole tensor is the identity group.
        return x

    # Glue: NCHW -> (n_batch, n_segment, C, H*W); hot path is lane-dense.
    xr = x.reshape(n_batch, n_segment, c, hw)

    # Aliased path: the identity group [fold2, c) is already correct in place,
    # so shrink the working set to the first 2*fold channels rounded up to the
    # dtype's sublane pack (8 f32 / 16 bf16 / 32 int8) -> ~33% less HBM traffic.
    if alias_input and fold2 < c:
        pack = max(8, 32 // itemsize)
        c_blk = min(c, _cdiv(fold2, pack) * pack)
    else:
        c_blk = c

    multi_core = _has_multiple_tensorcores()
    b_tile, hw_tile = _choose_tiles(n_batch, n_segment, c_blk, hw, itemsize,
                                    multi_core)
    grid = (_cdiv(n_batch, b_tile), _cdiv(hw, hw_tile))

    # NOTE: in/out index maps are identical and every output block is visited
    # exactly once -- this is the invariant that makes input_output_aliases
    # safe here.
    block = (b_tile, n_segment, c_blk, hw_tile)
    spec = pl.BlockSpec(block, lambda b, j: (b, 0, 0, j))

    # Explicit VMEM budget derived from the real block footprint
    # (in + out, double-buffered, +25% headroom), clamped to [32, 64] MiB so it
    # is valid on v5e/v6e (128 MiB physical) and v7x (64 MiB physical).
    block_bytes = b_tile * n_segment * c_blk * hw_tile * itemsize
    vmem_limit = int(min(max(4 * block_bytes * 5 // 4, _VMEM_LIMIT_FLOOR),
                         _VMEM_LIMIT_CEIL))
    # TODO(synk): for huge-C / tiny-HW activations whose single block exceeds
    # this budget, add a group-aligned channel grid axis instead of growing VMEM.

    kernel = functools.partial(_tsm_kernel, n_segment=n_segment,
                               fold1=fold1, fold2=fold2)

    out = pl.pallas_call(
        kernel,
        out_shape=jax.ShapeDtypeStruct(xr.shape, xr.dtype),
        grid=grid,
        in_specs=[spec],
        out_specs=spec,
        input_output_aliases={0: 0} if alias_input else {},
        compiler_params=pltpu.CompilerParams(
            dimension_semantics=("parallel", "parallel"),
            vmem_limit_bytes=vmem_limit),
    )(xr)

    return out.reshape(nt, c, h, w)


def tsm_reference(x, n_segment=N_SEGMENT, fold_div=FOLD_DIV):
    """Pure-JAX reference mirroring the PyTorch forward exactly."""
    nt, c, h, w = x.shape
    n_batch = nt // n_segment
    xr = x.reshape(n_batch, n_segment, c, h, w)
    fold = c // fold_div
    out = jnp.zeros_like(xr)
    out = out.at[:, :-1, :fold].set(xr[:, 1:, :fold])
    out = out.at[:, 1:, fold:2 * fold].set(xr[:, :-1, fold:2 * fold])
    out = out.at[:, :, 2 * fold:].set(xr[:, :, 2 * fold:])
    return out.reshape(nt, c, h, w)


if __name__ == "__main__":
    # Small shapes consistent with the module:
    # nt = n_batch * n_segment = 2 * 3 = 6, C = 12 (fold = 4), H = W = 16.
    key = jax.random.PRNGKey(0)
    x = jax.random.normal(key, (6, 12, 16, 16), dtype=jnp.float32)

    ref = tsm_reference(x)

    # Default (non-aliased) path.
    out = jax.block_until_ready(tsm_forward(x))
    assert out.shape == x.shape and out.dtype == x.dtype
    assert jnp.array_equal(out, ref), "Pallas TSM mismatch (default path)"

    # Aliased path (reduced channel working set).  x is not actually donated
    # here, so XLA inserts a defensive copy -- numerics must still match.
    out_alias = jax.block_until_ready(tsm_forward(x, alias_input=True))
    assert jnp.array_equal(out_alias, ref), "Pallas TSM mismatch (aliased path)"

    print("KERNEL_OK")
</pallas_src>

<mosaic_0001>
module attributes {stable_mosaic.version = 11 : i64} {
  func.func @_tsm_kernel(%arg0: i32, %arg1: i32, %arg2: memref<1x3x12x256xf32, #tpu.memory_space<vmem>>, %arg3: memref<1x3x12x256xf32, #tpu.memory_space<vmem>>) attributes {dimension_semantics = [#tpu.dimension_semantics<parallel>, #tpu.dimension_semantics<parallel>], iteration_bounds = array<i64: 2, 1>, scalar_prefetch = 0 : i64, scratch_operands = 0 : i64, tpu.core_type = #tpu.core_type<tc>, window_params = [{transform_indices = @transform_0, window_bounds = array<i64: 1, 3, 12, 256>}, {transform_indices = @transform_1, window_bounds = array<i64: 1, 3, 12, 256>}]} {
    %c0 = arith.constant 0 : index
    %c1 = arith.constant 1 : index
    %c0_0 = arith.constant 0 : index
    %c0_1 = arith.constant 0 : index
    %0 = vector.load %arg2[%c0, %c1, %c0_0, %c0_1] : memref<1x3x12x256xf32, #tpu.memory_space<vmem>>, vector<1x2x4x256xf32>
    %c0_2 = arith.constant 0 : index
    %c0_3 = arith.constant 0 : index
    %c0_4 = arith.constant 0 : index
    %c0_5 = arith.constant 0 : index
    %1 = vector.load %arg3[%c0_2, %c0_3, %c0_4, %c0_5] : memref<1x3x12x256xf32, #tpu.memory_space<vmem>>, vector<1x2x4x256xf32>
    tpu.vector_store %arg3[%c0_2, %c0_3, %c0_4, %c0_5], %0 {strides = array<i32>} : memref<1x3x12x256xf32, #tpu.memory_space<vmem>>, vector<1x2x4x256xf32>,
    %cst = arith.constant 0.000000e+00 : f32
    %2 = vector.broadcast %cst : f32 to vector<1x4x256xf32>
    %c0_6 = arith.constant 0 : index
    %c2 = arith.constant 2 : index
    %c0_7 = arith.constant 0 : index
    %c0_8 = arith.constant 0 : index
    %3 = vector.load %arg3[%c0_6, %c2, %c0_7, %c0_8] : memref<1x3x12x256xf32, #tpu.memory_space<vmem>>, vector<1x1x4x256xf32>
    %4 = vector.shape_cast %3 : vector<1x1x4x256xf32> to vector<1x4x256xf32>
    %5 = vector.shape_cast %2 : vector<1x4x256xf32> to vector<1x1x4x256xf32>
    tpu.vector_store %arg3[%c0_6, %c2, %c0_7, %c0_8], %5 {strides = array<i32>} : memref<1x3x12x256xf32, #tpu.memory_space<vmem>>, vector<1x1x4x256xf32>,
    %c0_9 = arith.constant 0 : index
    %c0_10 = arith.constant 0 : index
    %c4 = arith.constant 4 : index
    %c0_11 = arith.constant 0 : index
    %6 = vector.load %arg2[%c0_9, %c0_10, %c4, %c0_11] : memref<1x3x12x256xf32, #tpu.memory_space<vmem>>, vector<1x2x4x256xf32>
    %c0_12 = arith.constant 0 : index
    %c1_13 = arith.constant 1 : index
    %c4_14 = arith.constant 4 : index
    %c0_15 = arith.constant 0 : index
    %7 = vector.load %arg3[%c0_12, %c1_13, %c4_14, %c0_15] : memref<1x3x12x256xf32, #tpu.memory_space<vmem>>, vector<1x2x4x256xf32>
    tpu.vector_store %arg3[%c0_12, %c1_13, %c4_14, %c0_15], %6 {strides = array<i32>} : memref<1x3x12x256xf32, #tpu.memory_space<vmem>>, vector<1x2x4x256xf32>,
    %c0_16 = arith.constant 0 : index
    %c0_17 = arith.constant 0 : index
    %c4_18 = arith.constant 4 : index
    %c0_19 = arith.constant 0 : index
    %8 = vector.load %arg3[%c0_16, %c0_17, %c4_18, %c0_19] : memref<1x3x12x256xf32, #tpu.memory_space<vmem>>, vector<1x1x4x256xf32>
    %9 = vector.shape_cast %8 : vector<1x1x4x256xf32> to vector<1x4x256xf32>
    %10 = vector.shape_cast %2 : vector<1x4x256xf32> to vector<1x1x4x256xf32>
    tpu.vector_store %arg3[%c0_16, %c0_17, %c4_18, %c0_19], %10 {strides = array<i32>} : memref<1x3x12x256xf32, #tpu.memory_space<vmem>>, vector<1x1x4x256xf32>,
    %c0_20 = arith.constant 0 : index
    %c0_21 = arith.constant 0 : index
    %c8 = arith.constant 8 : index
    %c0_22 = arith.constant 0 : index
    %11 = vector.load %arg2[%c0_20, %c0_21, %c8, %c0_22] : memref<1x3x12x256xf32, #tpu.memory_space<vmem>>, vector<1x3x4x256xf32>
    %c0_23 = arith.constant 0 : index
    %c0_24 = arith.constant 0 : index
    %c8_25 = arith.constant 8 : index
    %c0_26 = arith.constant 0 : index
    %12 = vector.load %arg3[%c0_23, %c0_24, %c8_25, %c0_26] : memref<1x3x12x256xf32, #tpu.memory_space<vmem>>, vector<1x3x4x256xf32>
    tpu.vector_store %arg3[%c0_23, %c0_24, %c8_25, %c0_26], %11 {strides = array<i32>} : memref<1x3x12x256xf32, #tpu.memory_space<vmem>>, vector<1x3x4x256xf32>,
    return
  }
  func.func @transform_0(%arg0: i32, %arg1: i32) -> (i32, i32, i32, i32) {
    %c0_i32 = arith.constant 0 : i32
    %c0_i32_0 = arith.constant 0 : i32
    %c0_i32_1 = arith.constant 0 : i32
    return %arg0, %c0_i32, %c0_i32_0, %arg1 : i32, i32, i32, i32
  }
  func.func @transform_1(%arg0: i32, %arg1: i32) -> (i32, i32, i32, i32) {
    %c0_i32 = arith.constant 0 : i32
    %c0_i32_0 = arith.constant 0 : i32
    %c0_i32_1 = arith.constant 0 : i32
    return %arg0, %c0_i32, %c0_i32_0, %arg1 : i32, i32, i32, i32
  }
}

</mosaic_0001>

<llo_original>
// kernel: tpu_custom_call.1
$region0: #{tpu_custom_call.1}
  #allocation0 [shape = 'u32[]', space=smem, size = 0x4, offset = 0x4, fixed_abs, tag = 'smem constant byte address 0x4 - core index']
  #allocation1 [shape = 'u32[144,128]{1,0:T(1,128)}', space=vmem, size = 0x12000, scoped, tag = 'internal scratch']
  %s0 = inlined_call_operand.vmem [shape: f32[2,3,12,256], index: 0, kind: input, shape index: {}]
  %s1 = inlined_call_operand.vmem [shape: f32[2,3,12,256], index: 1, kind: output, shape index: {}]
  %s2 = sld [smem:[#allocation0]]
  $region37: #{tpu_custom_call.1} parent=0
    _
  %s4 = ssub.s32 1, %s2
  %s5 = scalar_select 0, %s4, %s2
  loop: start=0, step=1, limit=4
  $region2: #{tpu_custom_call.1} parent=0 // loop_pre_header
    _
  $region3: #{tpu_custom_call.1} parent=0 // loop_header
    %s7 = sphi 0, %s11
    %p8 = scmp.ge.s32.totalorder %s7, 4
    %s14 = sphi 0, %s26
    %s15 = sphi 0, %s22
    %s16 = sphi 0, %s14
    %s17 = sphi 0, %s15
    %s18 = sphi 0, %s16
    %s19 = sphi 0, %s17
    %s31 = sphi 0, %s33
    %s34 = sphi 0, %s31
    %s35 = sphi 0, %s34
    %s51 = sphi 0, %s35
    %s59 = sphi 0, %s61
    %s62 = sphi 0, %s59
    %s63 = sphi 0, %s62
    %s79 = sphi 0, %s63
  $region4: #{tpu_custom_call.1} parent=0 // loop_header_branch
    %10 = sbr.rel (%p8) target = $region8
  $region5: #{tpu_custom_call.1} parent=0 // loop_body
    %s12 = ssub.s32 %s7, 1
    %s13 = ssub.s32 %s7, 2
    %s20 = sadd.s32 1, %s15
    %p21 = scmp.ge.s32.totalorder %s20, 1
    %s22 = scalar_select %p21, 0, %s20
    %s23 = sadd.s32 1, %s14
    %s24 = scalar_select %p21, %s23, %s14
    %p25 = scmp.ge.s32.totalorder %s24, 2
    %s26 = scalar_select %p25, 0, %s24
    %s27 = ssub.s32 %s14, %s26
    %s28 = ssub.s32 %s15, %s22
    %s29 = sor.u32 %s27, %s28
    %p30 = scmp.eq.s32.totalorder %s29, 0
    %s32 = sadd.s32 %s31, 1
    %s33 = scalar_select %p30, %s31, %s32
    %p36 = pneg %p30
    %p37 = scmp.eq.s32.totalorder %s7, 1
    %p38 = por %p36, %p37
    %p39 = scmp.ne.s32.totalorder %s31, %s34
    %p40 = scmp.eq.s32.totalorder %s7, 0
    %p41 = por %p39, %p40
    %p42 = scmp.ne.s32.totalorder %s31, %s34
    %p43 = scmp.eq.s32.totalorder %s12, 1
    %p44 = por %p42, %p43
    %p45 = scmp.ne.s32.totalorder %s34, %s35
    %p46 = scmp.eq.s32.totalorder %s12, 0
    %p47 = por %p45, %p46
    %p48 = scmp.ne.s32.totalorder %s34, %s35
    %p49 = scmp.eq.s32.totalorder %s13, 1
    %p50 = por %p48, %p49
    %p52 = scmp.ne.s32.totalorder %s35, %s51
    %p53 = scmp.eq.s32.totalorder %s13, 0
    %p54 = por %p52, %p53
    %s55 = ssub.s32 %s14, %s26
    %s56 = ssub.s32 %s15, %s22
    %s57 = sor.u32 %s55, %s56
    %p58 = scmp.eq.s32.totalorder %s57, 0
    %s60 = sadd.s32 %s59, 1
    %s61 = scalar_select %p58, %s59, %s60
    %p64 = pneg %p58
    %p65 = scmp.eq.s32.totalorder %s7, 1
    %p66 = por %p64, %p65
    %p67 = scmp.ne.s32.totalorder %s59, %s62
    %p68 = scmp.eq.s32.totalorder %s7, 0
    %p69 = por %p67, %p68
    %p70 = scmp.ne.s32.totalorder %s59, %s62
    %p71 = scmp.eq.s32.totalorder %s12, 1
    %p72 = por %p70, %p71
    %p73 = scmp.ne.s32.totalorder %s62, %s63
    %p74 = scmp.eq.s32.totalorder %s12, 0
    %p75 = por %p73, %p74
    %p76 = scmp.ne.s32.totalorder %s62, %s63
    %p77 = scmp.eq.s32.totalorder %s13, 1
    %p78 = por %p76, %p77
    %p80 = scmp.ne.s32.totalorder %s63, %s79
    %p81 = scmp.eq.s32.totalorder %s13, 0
    %p82 = por %p80, %p81
    %p83 = scmp.le.s32.totalorder 1, %s7
    %p84 = scmp.lt.s32.totalorder %s7, 3
    %p85 = pnand %p83, %p84
    %p86 = pneg %p85
    // Predicated region
    $region9: #{tpu_custom_call.1} parent=5 // pred_check
      _
    $region10: #{tpu_custom_call.1} parent=5 // pred_check_branch
      %88 = sbr.rel (%p85) target = $region12
    $region11: #{tpu_custom_call.1} parent=5 // pred_region
      %s89 = ssub.s32 %s7, 1
    $region12: #{tpu_custom_call.1} parent=5 // pred_fallthru
      _
    %p90 = scmp.lt.s32.totalorder %s7, 2
    // Predicated region
    $region13: #{tpu_custom_call.1} parent=5 // pred_check
      %p91 = pneg %p90
    $region14: #{tpu_custom_call.1} parent=5 // pred_check_branch
      %93 = sbr.rel (%p91) target = $region16
    $region15: #{tpu_custom_call.1} parent=5 // pred_region
      // Predicated region
      $region17: #{tpu_custom_call.1} parent=15 // pred_check
        %p94 = pneg %p41
      $region18: #{tpu_custom_call.1} parent=15 // pred_check_branch
        %96 = sbr.rel (%p94) target = $region20
      $region19: #{tpu_custom_call.1} parent=15 // pred_region
        %s97 = smul.u32 2, %s15
        %p98 = scmp.lt.s32.totalorder %s14, 1
        %s99 = scalar_select %p98, %s14, 1
        %p100 = scmp.lt.s32.totalorder %s97, 1
        %s101 = scalar_select %p100, %s97, 1
        %s102 = smul.addr %s99, 12
        %s103 = sadd.s32 %s101, %s102
        %s104 = smul.addr %s103, 8
        %s105 = scalar_lea.vmem %s0, %s104
        %s106 = smul.u32 2, %s15
      $region20: #{tpu_custom_call.1} parent=15 // pred_fallthru
        _
    $region16: #{tpu_custom_call.1} parent=5 // pred_fallthru
      _
    %p107 = scmp.le.s32.totalorder 1, %s7
    %p108 = scmp.lt.s32.totalorder %s7, 3
    %p109 = pnand %p107, %p108
    %p110 = pneg %p109
    // Predicated region
    $region21: #{tpu_custom_call.1} parent=5 // pred_check
      _
    $region22: #{tpu_custom_call.1} parent=5 // pred_check_branch
      %112 = sbr.rel (%p109) target = $region24
    $region23: #{tpu_custom_call.1} parent=5 // pred_region
      %s113 = ssub.s32 %s7, 1
      %s114 = smul.u32 2, %s17
      %p115 = scmp.lt.s32.totalorder %s16, 1
      %s116 = scalar_select %p115, %s16, 1
      %p117 = scmp.lt.s32.totalorder %s114, 1
      %s118 = scalar_select %p117, %s114, 1
      %s119 = smul.addr %s116, 12
      %s120 = sadd.s32 %s118, %s119
      %s121 = smul.addr %s120, 8
      %s122 = scalar_lea.vmem %s0, %s121
      %p123 = pneg %p47
      %p124 = pneg %p44
      %p125 = pneg %p75
      %p126 = pneg %p72
      %s127 = smul.u32 2, %s17
      %p128 = scmp.lt.s32.totalorder %s16, 1
      %s129 = scalar_select %p128, %s16, 1
      %p130 = scmp.lt.s32.totalorder %s127, 1
      %s131 = scalar_select %p130, %s127, 1
      %s132 = smul.addr %s129, 12
      %s133 = sadd.s32 %s131, %s132
      %s134 = smul.addr %s133, 8
      %s135 = scalar_lea.vmem %s1, %s134
      %s136 = smul.u32 2, %s17
      %p137 = scmp.lt.s32.totalorder %s16, 1
      %s138 = scalar_select %p137, %s16, 1
      %p139 = scmp.lt.s32.totalorder %s136, 1
      %s140 = scalar_select %p139, %s136, 1
      %s141 = smul.addr %s138, 12
      %s142 = sadd.s32 %s140, %s141
      %s143 = smul.addr %s142, 8
      %s144 = scalar_lea.vmem %s0, %s143
      %s145 = smul.u32 2, %s17
      %s146 = smul.u32 2, %s17
      %p147 = scmp.lt.s32.totalorder %s16, 1
      %s148 = scalar_select %p147, %s16, 1
      %p149 = scmp.lt.s32.totalorder %s146, 1
      %s150 = scalar_select %p149, %s146, 1
      %s151 = smul.addr %s148, 12
      %s152 = sadd.s32 %s150, %s151
      %s153 = smul.addr %s152, 8
      %s154 = scalar_lea.vmem %s1, %s153
      %s155 = smul.u32 2, %s17
      %s156 = scalar_lea.vmem %s144, 32
      %v157 = vld [vmem:[%s156] sm:$0xf]
      %v158 = vld [vmem:[%s156 + $0x8] sm:$0xf]
      %v159 = vld [vmem:[%s156 + $0x20] sm:$0xf]
      %v160 = vld [vmem:[%s156 + $0x28] sm:$0xf]
      %161 = vst [vmem:[%s154] sm:$0xf] %v157
      %162 = vst [vmem:[%s154 + $0x8] sm:$0xf] %v158
      %163 = vst [vmem:[%s154 + $0x20] sm:$0xf] %v159
      %164 = vst [vmem:[%s154 + $0x28] sm:$0xf] %v160
      %s165 = scalar_lea.vmem %s154, 64
      %166 = vst [vmem:[%s165] sm:$0xf] 0.0
      %167 = vst [vmem:[%s165 + $0x8] sm:$0xf] 0.0
      %v168 = vld [vmem:[%s144] sm:$0xf0]
      %v169 = vld [vmem:[%s144 + $0x8] sm:$0xf0]
      %v170 = vld [vmem:[%s144 + $0x20] sm:$0xf0]
      %v171 = vld [vmem:[%s144 + $0x28] sm:$0xf0]
      %s172 = scalar_lea.vmem %s154, 32
      %173 = vst [vmem:[%s172] sm:$0xf0] %v168
      %174 = vst [vmem:[%s172 + $0x8] sm:$0xf0] %v169
      %175 = vst [vmem:[%s172 + $0x20] sm:$0xf0] %v170
      %176 = vst [vmem:[%s172 + $0x28] sm:$0xf0] %v171
      %177 = vst [vmem:[%s154] sm:$0xf0] 0.0
      %178 = vst [vmem:[%s154 + $0x8] sm:$0xf0] 0.0
      %v179 = vld [vmem:[%s144 + $0x10] sm:$0xf]
      %v180 = vld [vmem:[%s144 + $0x18] sm:$0xf]
      %v181 = vld [vmem:[%s144 + $0x30] sm:$0xf]
      %v182 = vld [vmem:[%s144 + $0x38] sm:$0xf]
      %v183 = vld [vmem:[%s144 + $0x50] sm:$0xf]
      %v184 = vld [vmem:[%s144 + $0x58] sm:$0xf]
      %185 = vst [vmem:[%s154 + $0x10] sm:$0xf] %v179
      %186 = vst [vmem:[%s154 + $0x18] sm:$0xf] %v180
      %187 = vst [vmem:[%s154 + $0x30] sm:$0xf] %v181
      %188 = vst [vmem:[%s154 + $0x38] sm:$0xf] %v182
      %189 = vst [vmem:[%s154 + $0x50] sm:$0xf] %v183
      %190 = vst [vmem:[%s154 + $0x58] sm:$0xf] %v184
      %s191 = smul.u32 2, %s17
      %p192 = scmp.lt.s32.totalorder %s16, 1
      %s193 = scalar_select %p192, %s16, 1
      %p194 = scmp.lt.s32.totalorder %s191, 1
      %s195 = scalar_select %p194, %s191, 1
      %s196 = smul.addr %s193, 12
      %s197 = sadd.s32 %s195, %s196
      %s198 = smul.addr %s197, 8
      %s199 = scalar_lea.vmem %s1, %s198
      // Predicated region
      $region25: #{tpu_custom_call.1} parent=23 // pred_check
        %p200 = pneg %p72
      $region26: #{tpu_custom_call.1} parent=23 // pred_check_branch
        %202 = sbr.rel (%p200) target = $region28
      $region27: #{tpu_custom_call.1} parent=23 // pred_region
        %s203 = smul.u32 2, %s17
      $region28: #{tpu_custom_call.1} parent=23 // pred_fallthru
        _
    $region24: #{tpu_custom_call.1} parent=5 // pred_fallthru
      _
    %p204 = scmp.le.s32.totalorder 2, %s7
    // Predicated region
    $region29: #{tpu_custom_call.1} parent=5 // pred_check
      %p205 = pneg %p204
    $region30: #{tpu_custom_call.1} parent=5 // pred_check_branch
      %207 = sbr.rel (%p205) target = $region32
    $region31: #{tpu_custom_call.1} parent=5 // pred_region
      %s208 = ssub.s32 %s7, 2
      // Predicated region
      $region33: #{tpu_custom_call.1} parent=31 // pred_check
        %p209 = pneg %p78
      $region34: #{tpu_custom_call.1} parent=31 // pred_check_branch
        %211 = sbr.rel (%p209) target = $region36
      $region35: #{tpu_custom_call.1} parent=31 // pred_region
        %s212 = smul.u32 2, %s19
        %p213 = scmp.lt.s32.totalorder %s18, 1
        %s214 = scalar_select %p213, %s18, 1
        %p215 = scmp.lt.s32.totalorder %s212, 1
        %s216 = scalar_select %p215, %s212, 1
        %s217 = smul.addr %s214, 12
        %s218 = sadd.s32 %s216, %s217
        %s219 = smul.addr %s218, 8
        %s220 = scalar_lea.vmem %s1, %s219
      $region36: #{tpu_custom_call.1} parent=31 // pred_fallthru
        _
    $region32: #{tpu_custom_call.1} parent=5 // pred_fallthru
      _
  $region6: #{tpu_custom_call.1} parent=0 // loop_footer
    %s11 = sadd.s32 1, %s7
  $region7: #{tpu_custom_call.1} parent=0 // loop_footer_branch
    %6 = sbr.rel target = $region3
  $region8: #{tpu_custom_call.1} parent=0 // loop_exit
    _

</llo_original>
